<compile_context>
chip_gen: v5e
topology: v5e:2x2
jax: 0.10.0
libtpu: 0.0.40
codegen_flags: <defaults>
</compile_context>

<pallas_src>
import jax
import jax.numpy as jnp
import numpy as np
from jax.experimental import pallas as pl
from jax.experimental.pallas import tpu as pltpu


def _shift_lanes_with_fill(x, direction, fill_col):
    """result[:, m] = x[:, m - direction]; the column shifted in is `fill_col`.

    direction=+1 -> previous column (result[:, 0]  = fill_col)
    direction=-1 -> next column     (result[:, -1] = fill_col)
    """
    c, lt = x.shape
    if lt % 128 == 0:
        # Lane rotation runs on the XLU slot (idle next to MXU/VPU) -> ~free.
        shift = 1 if direction > 0 else lt - 1
        edge = 0 if direction > 0 else lt - 1
        rolled = pltpu.roll(x, shift, axis=1)
        col = jax.lax.broadcasted_iota(jnp.int32, (c, lt), 1)
        return jnp.where(col == edge, jnp.broadcast_to(fill_col, (c, lt)), rolled)
    # Small / lane-unaligned tiles: slice + concat (always lowerable).
    if direction > 0:
        return jnp.concatenate([fill_col, x[:, : lt - 1]], axis=1)
    return jnp.concatenate([x[:, 1:], fill_col], axis=1)


def _upsample1d_kernel(x_ref, halo_ref, w_ref, b_ref, o_ref):
    # x_ref:    (1, C, Lt)     input tile, C on sublanes / L on lanes
    # halo_ref: (1, 1, C, 2)   [..., 0] = x[:, tile_start-1], [..., 1] = x[:, tile_end]
    # w_ref:    (2, C, 2C)     w_ref[0] = [W1^T | W3^T],  w_ref[1] = [W2^T | W0^T]
    # b_ref:    (C, 1)         float32 bias column
    # o_ref:    (1, 2, C, Lt)  plane 0 -> out[:, 2m], plane 1 -> out[:, 2m+1]
    x = x_ref[0]                                   # keep native dtype (bf16 stays bf16)
    halo = halo_ref[0, 0]                          # (C, 2)
    x_prev = _shift_lanes_with_fill(x, +1, halo[:, 0:1])
    x_next = _shift_lanes_with_fill(x, -1, halo[:, 1:2])

    # Tap-pair fused matmuls: contraction depth 2*C fills the 256-deep MXU on
    # v6e/v7x and halves the number of matmul issues.
    xe = jnp.concatenate([x, x_prev], axis=0)      # (2C, Lt)
    xo = jnp.concatenate([x, x_next], axis=0)      # (2C, Lt)
    bias = b_ref[...]                              # (C, 1) f32
    even = jnp.dot(w_ref[0], xe, preferred_element_type=jnp.float32) + bias
    odd = jnp.dot(w_ref[1], xo, preferred_element_type=jnp.float32) + bias

    # Two contiguous lane-dense plane stores; interleave happens in the wrapper.
    o_ref[0, 0] = even.astype(o_ref.dtype)
    o_ref[0, 1] = odd.astype(o_ref.dtype)


def upsample1d(x, weight, bias):
    """x: (B, C, L) NCL; weight: (C, C, 4) ConvTranspose1d layout; bias: (C,)."""
    B, C, L = x.shape
    dtype = x.dtype

    # ---- L tiling: keep the double-buffered working set a few MiB (v7x only has
    # 64 MiB VMEM); tiles are multiples of 128 lanes so stores stay unmasked.
    # Small L -> single full-extent block (always (8,128)-legal).
    budget = 4 * 1024 * 1024
    max_lt = max(128, budget // (10 * C * 4))
    if L <= max_lt:
        l_tile, l_pad = L, L
    else:
        l_tile = (max_lt // 128) * 128
        l_pad = ((L + l_tile - 1) // l_tile) * l_tile
    n_tiles = l_pad // l_tile

    x_pad = x if l_pad == L else jnp.pad(x, ((0, 0), (0, 0), (0, l_pad - L)))

    # ---- 1-column halos per tile (x[:, m-1] / x[:, m+1] across tile edges;
    # zeros at the sequence boundary == ConvTranspose1d padding behaviour).
    zero_col = jnp.zeros((B, C, 1), dtype)
    prev_cols = jnp.concatenate(
        [zero_col, x_pad[:, :, l_tile - 1:l_pad - 1:l_tile]], axis=2)      # (B,C,nt)
    next_cols = jnp.concatenate(
        [x_pad[:, :, l_tile:l_pad:l_tile], zero_col], axis=2)              # (B,C,nt)
    halo = jnp.transpose(jnp.stack([prev_cols, next_cols], axis=-1),
                         (0, 2, 1, 3))                                     # (B,nt,C,2)

    # ---- tap-pair fused weights, prestacked here (weight concat is free) and
    # kept in the activation dtype so bf16 activations feed bf16 MXU operands.
    w = weight.astype(dtype)
    w_even = jnp.concatenate([w[:, :, 1].T, w[:, :, 3].T], axis=1)         # (C, 2C)
    w_odd = jnp.concatenate([w[:, :, 2].T, w[:, :, 0].T], axis=1)          # (C, 2C)
    w_fused = jnp.stack([w_even, w_odd], axis=0)                           # (2, C, 2C)
    b_col = bias.astype(jnp.float32).reshape(C, 1)

    # ---- explicit VMEM budget derived from the chosen tiles (+ headroom).
    isz = jnp.dtype(dtype).itemsize
    tile_io = (C * l_tile + 2 * C * l_tile + 2 * C) * isz
    wgt = 2 * C * 2 * C * isz + 4 * C
    scratch = 8 * C * l_tile * 4
    vmem_limit = int(min(max(2 * tile_io + 2 * wgt + scratch + (2 << 20),
                             16 << 20), 64 << 20))

    out_planes = pl.pallas_call(
        _upsample1d_kernel,
        out_shape=jax.ShapeDtypeStruct((B, 2, C, l_pad), dtype),
        grid_spec=pltpu.PrefetchScalarGridSpec(
            num_scalar_prefetch=0,
            grid=(B, n_tiles),
            in_specs=[
                pl.BlockSpec((1, C, l_tile), lambda b, l: (b, 0, l)),
                pl.BlockSpec((1, 1, C, 2), lambda b, l: (b, l, 0, 0)),
                pl.BlockSpec((2, C, 2 * C), lambda b, l: (0, 0, 0)),   # resident weights
                pl.BlockSpec((C, 1), lambda b, l: (0, 0)),             # resident bias
            ],
            out_specs=pl.BlockSpec((1, 2, C, l_tile), lambda b, l: (b, 0, 0, l)),
        ),
        compiler_params=pltpu.CompilerParams(
            # both grid axes are independent -> shards across v7x's 2 TensorCores
            dimension_semantics=("parallel", "parallel"),
            vmem_limit_bytes=vmem_limit,
        ),
    )(x_pad, halo, w_fused, b_col)

    # Interleave even/odd planes: (B,2,C,Lp) -> (B,C,Lp,2) -> (B,C,2*Lp); the
    # final minor-dim merge reshape is free, so this is one HBM pass total.
    # TODO(synk): callers that can consume the even/odd planes (or channel-last
    # data) directly can skip this interleave pass entirely.
    out = jnp.transpose(out_planes, (0, 2, 3, 1)).reshape(B, C, 2 * l_pad)
    if l_pad != L:
        out = out[:, :, : 2 * L]
    return out


def _reference_conv_transpose1d(x, w, b):
    # Direct definition: out[b, co, l*2 - 1 + k] += x[b, ci, l] * w[ci, co, k]
    x = np.asarray(x, np.float64)
    w = np.asarray(w, np.float64)
    b = np.asarray(b, np.float64)
    B, Cin, L = x.shape
    _, Cout, K = w.shape
    stride, pad = 2, 1
    L_out = (L - 1) * stride - 2 * pad + K
    out = np.zeros((B, Cout, L_out))
    for bi in range(B):
        for l in range(L):
            for k in range(K):
                t = l * stride - pad + k
                if 0 <= t < L_out:
                    out[bi, :, t] += x[bi, :, l] @ w[:, :, k]
    out += b[None, :, None]
    return out


if __name__ == "__main__":
    key = jax.random.PRNGKey(0)
    k_x, k_w, k_b = jax.random.split(key, 3)

    B, C, L = 2, 4, 16
    x = jax.random.normal(k_x, (B, C, L), dtype=jnp.float32)
    # ConvTranspose1d weight shape: (in_channels, out_channels, kernel_size)
    weight = 0.1 * jax.random.normal(k_w, (C, C, 4), dtype=jnp.float32)
    bias = 0.1 * jax.random.normal(k_b, (C,), dtype=jnp.float32)

    out = jax.jit(upsample1d)(x, weight, bias)
    out = jax.block_until_ready(out)

    ref = _reference_conv_transpose1d(x, weight, bias)
    assert out.shape == (B, C, 2 * L), out.shape
    np.testing.assert_allclose(np.asarray(out), ref, rtol=1e-4, atol=1e-4)

    print("KERNEL_OK")
</pallas_src>

<mosaic_0001>
module attributes {stable_mosaic.version = 11 : i64} {
  func.func @_upsample1d_kernel(%arg0: i32, %arg1: i32, %arg2: memref<1x4x16xf32, #tpu.memory_space<vmem>>, %arg3: memref<1x1x4x2xf32, #tpu.memory_space<vmem>>, %arg4: memref<2x4x8xf32, #tpu.memory_space<vmem>>, %arg5: memref<4x1xf32, #tpu.memory_space<vmem>>, %arg6: memref<1x2x4x16xf32, #tpu.memory_space<vmem>>) attributes {dimension_semantics = [#tpu.dimension_semantics<parallel>, #tpu.dimension_semantics<parallel>], iteration_bounds = array<i64: 2, 1>, scalar_prefetch = 0 : i64, scratch_operands = 0 : i64, tpu.core_type = #tpu.core_type<tc>, window_params = [{transform_indices = @transform_0, window_bounds = array<i64: 1, 4, 16>}, {transform_indices = @transform_1, window_bounds = array<i64: 1, 1, 4, 2>}, {pipeline_mode = #tpu.pipeline_mode<synchronous>, transform_indices = @transform_2, window_bounds = array<i64: 2, 4, 8>}, {pipeline_mode = #tpu.pipeline_mode<synchronous>, transform_indices = @transform_3, window_bounds = array<i64: 4, 1>}, {transform_indices = @transform_4, window_bounds = array<i64: 1, 2, 4, 16>}]} {
    %c0 = arith.constant 0 : index
    %c0_0 = arith.constant 0 : index
    %c0_1 = arith.constant 0 : index
    %0 = vector.load %arg2[%c0, %c0_0, %c0_1] : memref<1x4x16xf32, #tpu.memory_space<vmem>>, vector<1x4x16xf32>
    %1 = vector.shape_cast %0 : vector<1x4x16xf32> to vector<4x16xf32>
    %c0_2 = arith.constant 0 : index
    %c0_3 = arith.constant 0 : index
    %c0_4 = arith.constant 0 : index
    %c0_5 = arith.constant 0 : index
    %2 = vector.load %arg3[%c0_2, %c0_3, %c0_4, %c0_5] : memref<1x1x4x2xf32, #tpu.memory_space<vmem>>, vector<1x1x4x2xf32>
    %3 = vector.shape_cast %2 : vector<1x1x4x2xf32> to vector<4x2xf32>
    %4 = vector.extract_strided_slice %3 {offsets = [0, 0], sizes = [4, 1], strides = [1, 1]} : vector<4x2xf32> to vector<4x1xf32>
    %5 = vector.extract_strided_slice %1 {offsets = [0, 0], sizes = [4, 15], strides = [1, 1]} : vector<4x16xf32> to vector<4x15xf32>
    %6 = tpu.concatenate %4, %5 in 1 : vector<4x1xf32>, vector<4x15xf32> -> vector<4x16xf32>
    %7 = vector.extract_strided_slice %3 {offsets = [0, 1], sizes = [4, 1], strides = [1, 1]} : vector<4x2xf32> to vector<4x1xf32>
    %8 = vector.extract_strided_slice %1 {offsets = [0, 1], sizes = [4, 15], strides = [1, 1]} : vector<4x16xf32> to vector<4x15xf32>
    %9 = tpu.concatenate %8, %7 in 1 : vector<4x15xf32>, vector<4x1xf32> -> vector<4x16xf32>
    %10 = tpu.concatenate %1, %6 in 0 : vector<4x16xf32>, vector<4x16xf32> -> vector<8x16xf32>
    %11 = tpu.concatenate %1, %9 in 0 : vector<4x16xf32>, vector<4x16xf32> -> vector<8x16xf32>
    %c0_6 = arith.constant 0 : index
    %c0_7 = arith.constant 0 : index
    %12 = vector.load %arg5[%c0_6, %c0_7] : memref<4x1xf32, #tpu.memory_space<vmem>>, vector<4x1xf32>
    %c0_8 = arith.constant 0 : index
    %c0_9 = arith.constant 0 : index
    %c0_10 = arith.constant 0 : index
    %13 = vector.load %arg4[%c0_8, %c0_9, %c0_10] : memref<2x4x8xf32, #tpu.memory_space<vmem>>, vector<1x4x8xf32>
    %14 = vector.shape_cast %13 : vector<1x4x8xf32> to vector<4x8xf32>
    %cst = arith.constant dense<0.000000e+00> : vector<4x16xf32>
    %15 = tpu.matmul %14, %10, %cst {dimension_numbers = #tpu.dot_dimension_numbers<[1], [0], [0], [1], [0, 0, 1, 1], [], []>} : vector<4x8xf32>, vector<8x16xf32>, vector<4x16xf32> -> vector<4x16xf32>
    %16 = vector.broadcast %12 : vector<4x1xf32> to vector<4x16xf32>
    %17 = arith.addf %15, %16 : vector<4x16xf32>
    %c1 = arith.constant 1 : index
    %c0_11 = arith.constant 0 : index
    %c0_12 = arith.constant 0 : index
    %18 = vector.load %arg4[%c1, %c0_11, %c0_12] : memref<2x4x8xf32, #tpu.memory_space<vmem>>, vector<1x4x8xf32>
    %19 = vector.shape_cast %18 : vector<1x4x8xf32> to vector<4x8xf32>
    %cst_13 = arith.constant dense<0.000000e+00> : vector<4x16xf32>
    %20 = tpu.matmul %19, %11, %cst_13 {dimension_numbers = #tpu.dot_dimension_numbers<[1], [0], [0], [1], [0, 0, 1, 1], [], []>} : vector<4x8xf32>, vector<8x16xf32>, vector<4x16xf32> -> vector<4x16xf32>
    %21 = vector.broadcast %12 : vector<4x1xf32> to vector<4x16xf32>
    %22 = arith.addf %20, %21 : vector<4x16xf32>
    %c0_14 = arith.constant 0 : index
    %c0_15 = arith.constant 0 : index
    %c0_16 = arith.constant 0 : index
    %c0_17 = arith.constant 0 : index
    %23 = vector.load %arg6[%c0_14, %c0_15, %c0_16, %c0_17] : memref<1x2x4x16xf32, #tpu.memory_space<vmem>>, vector<1x1x4x16xf32>
    %24 = vector.shape_cast %23 : vector<1x1x4x16xf32> to vector<4x16xf32>
    %25 = vector.shape_cast %17 : vector<4x16xf32> to vector<1x1x4x16xf32>
    tpu.vector_store %arg6[%c0_14, %c0_15, %c0_16, %c0_17], %25 {strides = array<i32>} : memref<1x2x4x16xf32, #tpu.memory_space<vmem>>, vector<1x1x4x16xf32>,
    %c0_18 = arith.constant 0 : index
    %c1_19 = arith.constant 1 : index
    %c0_20 = arith.constant 0 : index
    %c0_21 = arith.constant 0 : index
    %26 = vector.load %arg6[%c0_18, %c1_19, %c0_20, %c0_21] : memref<1x2x4x16xf32, #tpu.memory_space<vmem>>, vector<1x1x4x16xf32>
    %27 = vector.shape_cast %26 : vector<1x1x4x16xf32> to vector<4x16xf32>
    %28 = vector.shape_cast %22 : vector<4x16xf32> to vector<1x1x4x16xf32>
    tpu.vector_store %arg6[%c0_18, %c1_19, %c0_20, %c0_21], %28 {strides = array<i32>} : memref<1x2x4x16xf32, #tpu.memory_space<vmem>>, vector<1x1x4x16xf32>,
    return
  }
  func.func @transform_0(%arg0: i32, %arg1: i32) -> (i32, i32, i32) {
    %c0_i32 = arith.constant 0 : i32
    %c0_i32_0 = arith.constant 0 : i32
    return %arg0, %c0_i32, %arg1 : i32, i32, i32
  }
  func.func @transform_1(%arg0: i32, %arg1: i32) -> (i32, i32, i32, i32) {
    %c0_i32 = arith.constant 0 : i32
    %c0_i32_0 = arith.constant 0 : i32
    %c0_i32_1 = arith.constant 0 : i32
    return %arg0, %arg1, %c0_i32, %c0_i32_0 : i32, i32, i32, i32
  }
  func.func @transform_2(%arg0: i32, %arg1: i32) -> (i32, i32, i32) {
    %c0_i32 = arith.constant 0 : i32
    %c0_i32_0 = arith.constant 0 : i32
    %c0_i32_1 = arith.constant 0 : i32
    %c0_i32_2 = arith.constant 0 : i32
    return %c0_i32, %c0_i32_0, %c0_i32_1 : i32, i32, i32
  }
  func.func @transform_3(%arg0: i32, %arg1: i32) -> (i32, i32) {
    %c0_i32 = arith.constant 0 : i32
    %c0_i32_0 = arith.constant 0 : i32
    %c0_i32_1 = arith.constant 0 : i32
    return %c0_i32, %c0_i32_0 : i32, i32
  }
  func.func @transform_4(%arg0: i32, %arg1: i32) -> (i32, i32, i32, i32) {
    %c0_i32 = arith.constant 0 : i32
    %c0_i32_0 = arith.constant 0 : i32
    %c0_i32_1 = arith.constant 0 : i32
    return %arg0, %c0_i32, %c0_i32_0, %arg1 : i32, i32, i32, i32
  }
}

</mosaic_0001>

<llo_original>
// kernel: upsample1d.1
$region0: #{upsample1d.1}
  #allocation0 [shape = 'u32[]', space=smem, size = 0x4, offset = 0x4, fixed_abs, tag = 'smem constant byte address 0x4 - core index']
  #allocation1 [shape = 'u32[72,128]{1,0:T(1,128)}', space=vmem, size = 0x9000, scoped, tag = 'internal scratch']
  %s0 = inlined_call_operand.vmem [shape: f32[2,4,16], index: 0, kind: input, shape index: {}]
  %s1 = inlined_call_operand.vmem [shape: f32[2,1,4,2], index: 1, kind: input, shape index: {}]
  %s2 = inlined_call_operand.vmem [shape: f32[2,4,8], index: 2, kind: input, shape index: {}]
  %s3 = inlined_call_operand.vmem [shape: f32[4,1], index: 3, kind: input, shape index: {}]
  %s4 = inlined_call_operand.vmem [shape: f32[2,2,4,16], index: 4, kind: output, shape index: {}]
  %s5 = sld [smem:[#allocation0]]
  $region49: #{upsample1d.1} parent=0
    _
  %s7 = ssub.s32 1, %s5
  %s8 = scalar_select 0, %s7, %s5
  loop: start=0, step=1, limit=4
  $region2: #{upsample1d.1} parent=0 // loop_pre_header
    _
  $region3: #{upsample1d.1} parent=0 // loop_header
    %s10 = sphi 0, %s14
    %p11 = scmp.ge.s32.totalorder %s10, 4
    %s17 = sphi 0, %s29
    %s18 = sphi 0, %s25
    %s19 = sphi 0, %s17
    %s20 = sphi 0, %s18
    %s21 = sphi 0, %s19
    %s22 = sphi 0, %s20
    %s34 = sphi 0, %s36
    %s37 = sphi 0, %s34
    %s38 = sphi 0, %s37
    %s54 = sphi 0, %s38
    %s62 = sphi 0, %s64
    %s65 = sphi 0, %s62
    %s66 = sphi 0, %s65
    %s82 = sphi 0, %s66
    %s86 = sphi 0, %s86
    %s88 = sphi 0, %s86
    %s89 = sphi 0, %s88
    %s103 = sphi 0, %s89
    %s107 = sphi 0, %s107
    %s109 = sphi 0, %s107
    %s110 = sphi 0, %s109
    %s124 = sphi 0, %s110
    %s132 = sphi 0, %s134
    %s135 = sphi 0, %s132
    %s136 = sphi 0, %s135
    %s152 = sphi 0, %s136
  $region4: #{upsample1d.1} parent=0 // loop_header_branch
    %13 = sbr.rel (%p11) target = $region8
  $region5: #{upsample1d.1} parent=0 // loop_body
    %s15 = ssub.s32 %s10, 1
    %s16 = ssub.s32 %s10, 2
    %s23 = sadd.s32 1, %s18
    %p24 = scmp.ge.s32.totalorder %s23, 1
    %s25 = scalar_select %p24, 0, %s23
    %s26 = sadd.s32 1, %s17
    %s27 = scalar_select %p24, %s26, %s17
    %p28 = scmp.ge.s32.totalorder %s27, 2
    %s29 = scalar_select %p28, 0, %s27
    %s30 = ssub.s32 %s17, %s29
    %s31 = ssub.s32 %s18, %s25
    %s32 = sor.u32 %s30, %s31
    %p33 = scmp.eq.s32.totalorder %s32, 0
    %s35 = sadd.s32 %s34, 1
    %s36 = scalar_select %p33, %s34, %s35
    %p39 = pneg %p33
    %p40 = scmp.eq.s32.totalorder %s10, 1
    %p41 = por %p39, %p40
    %p42 = scmp.ne.s32.totalorder %s34, %s37
    %p43 = scmp.eq.s32.totalorder %s10, 0
    %p44 = por %p42, %p43
    %p45 = scmp.ne.s32.totalorder %s34, %s37
    %p46 = scmp.eq.s32.totalorder %s15, 1
    %p47 = por %p45, %p46
    %p48 = scmp.ne.s32.totalorder %s37, %s38
    %p49 = scmp.eq.s32.totalorder %s15, 0
    %p50 = por %p48, %p49
    %p51 = scmp.ne.s32.totalorder %s37, %s38
    %p52 = scmp.eq.s32.totalorder %s16, 1
    %p53 = por %p51, %p52
    %p55 = scmp.ne.s32.totalorder %s38, %s54
    %p56 = scmp.eq.s32.totalorder %s16, 0
    %p57 = por %p55, %p56
    %s58 = ssub.s32 %s17, %s29
    %s59 = ssub.s32 %s18, %s25
    %s60 = sor.u32 %s58, %s59
    %p61 = scmp.eq.s32.totalorder %s60, 0
    %s63 = sadd.s32 %s62, 1
    %s64 = scalar_select %p61, %s62, %s63
    %p67 = pneg %p61
    %p68 = scmp.eq.s32.totalorder %s10, 1
    %p69 = por %p67, %p68
    %p70 = scmp.ne.s32.totalorder %s62, %s65
    %p71 = scmp.eq.s32.totalorder %s10, 0
    %p72 = por %p70, %p71
    %p73 = scmp.ne.s32.totalorder %s62, %s65
    %p74 = scmp.eq.s32.totalorder %s15, 1
    %p75 = por %p73, %p74
    %p76 = scmp.ne.s32.totalorder %s65, %s66
    %p77 = scmp.eq.s32.totalorder %s15, 0
    %p78 = por %p76, %p77
    %p79 = scmp.ne.s32.totalorder %s65, %s66
    %p80 = scmp.eq.s32.totalorder %s16, 1
    %p81 = por %p79, %p80
    %p83 = scmp.ne.s32.totalorder %s66, %s82
    %p84 = scmp.eq.s32.totalorder %s16, 0
    %p85 = por %p83, %p84
    %s87 = sadd.s32 %s86, 1
    %p90 = scmp.eq.s32.totalorder %s10, 1
    %p91 = scmp.ne.s32.totalorder %s86, %s88
    %p92 = scmp.eq.s32.totalorder %s10, 0
    %p93 = por %p91, %p92
    %p94 = scmp.ne.s32.totalorder %s86, %s88
    %p95 = scmp.eq.s32.totalorder %s15, 1
    %p96 = por %p94, %p95
    %p97 = scmp.ne.s32.totalorder %s88, %s89
    %p98 = scmp.eq.s32.totalorder %s15, 0
    %p99 = por %p97, %p98
    %p100 = scmp.ne.s32.totalorder %s88, %s89
    %p101 = scmp.eq.s32.totalorder %s16, 1
    %p102 = por %p100, %p101
    %p104 = scmp.ne.s32.totalorder %s89, %s103
    %p105 = scmp.eq.s32.totalorder %s16, 0
    %p106 = por %p104, %p105
    %s108 = sadd.s32 %s107, 1
    %p111 = scmp.eq.s32.totalorder %s10, 1
    %p112 = scmp.ne.s32.totalorder %s107, %s109
    %p113 = scmp.eq.s32.totalorder %s10, 0
    %p114 = por %p112, %p113
    %p115 = scmp.ne.s32.totalorder %s107, %s109
    %p116 = scmp.eq.s32.totalorder %s15, 1
    %p117 = por %p115, %p116
    %p118 = scmp.ne.s32.totalorder %s109, %s110
    %p119 = scmp.eq.s32.totalorder %s15, 0
    %p120 = por %p118, %p119
    %p121 = scmp.ne.s32.totalorder %s109, %s110
    %p122 = scmp.eq.s32.totalorder %s16, 1
    %p123 = por %p121, %p122
    %p125 = scmp.ne.s32.totalorder %s110, %s124
    %p126 = scmp.eq.s32.totalorder %s16, 0
    %p127 = por %p125, %p126
    %s128 = ssub.s32 %s17, %s29
    %s129 = ssub.s32 %s18, %s25
    %s130 = sor.u32 %s128, %s129
    %p131 = scmp.eq.s32.totalorder %s130, 0
    %s133 = sadd.s32 %s132, 1
    %s134 = scalar_select %p131, %s132, %s133
    %p137 = pneg %p131
    %p138 = scmp.eq.s32.totalorder %s10, 1
    %p139 = por %p137, %p138
    %p140 = scmp.ne.s32.totalorder %s132, %s135
    %p141 = scmp.eq.s32.totalorder %s10, 0
    %p142 = por %p140, %p141
    %p143 = scmp.ne.s32.totalorder %s132, %s135
    %p144 = scmp.eq.s32.totalorder %s15, 1
    %p145 = por %p143, %p144
    %p146 = scmp.ne.s32.totalorder %s135, %s136
    %p147 = scmp.eq.s32.totalorder %s15, 0
    %p148 = por %p146, %p147
    %p149 = scmp.ne.s32.totalorder %s135, %s136
    %p150 = scmp.eq.s32.totalorder %s16, 1
    %p151 = por %p149, %p150
    %p153 = scmp.ne.s32.totalorder %s136, %s152
    %p154 = scmp.eq.s32.totalorder %s16, 0
    %p155 = por %p153, %p154
    %p156 = scmp.le.s32.totalorder 1, %s10
    %p157 = scmp.lt.s32.totalorder %s10, 3
    %p158 = pnand %p156, %p157
    %p159 = pneg %p158
    // Predicated region
    $region9: #{upsample1d.1} parent=5 // pred_check
      _
    $region10: #{upsample1d.1} parent=5 // pred_check_branch
      %161 = sbr.rel (%p158) target = $region12
    $region11: #{upsample1d.1} parent=5 // pred_region
      %s162 = ssub.s32 %s10, 1
      // Predicated region
      $region13: #{upsample1d.1} parent=11 // pred_check
        %p163 = pneg %p99
      $region14: #{upsample1d.1} parent=11 // pred_check_branch
        %165 = sbr.rel (%p163) target = $region16
      $region15: #{upsample1d.1} parent=11 // pred_region
        _
      $region16: #{upsample1d.1} parent=11 // pred_fallthru
        _
      // Predicated region
      $region17: #{upsample1d.1} parent=11 // pred_check
        %p166 = pneg %p120
      $region18: #{upsample1d.1} parent=11 // pred_check_branch
        %168 = sbr.rel (%p166) target = $region20
      $region19: #{upsample1d.1} parent=11 // pred_region
        _
      $region20: #{upsample1d.1} parent=11 // pred_fallthru
        _
    $region12: #{upsample1d.1} parent=5 // pred_fallthru
      _
    %p169 = scmp.lt.s32.totalorder %s10, 2
    // Predicated region
    $region21: #{upsample1d.1} parent=5 // pred_check
      %p170 = pneg %p169
    $region22: #{upsample1d.1} parent=5 // pred_check_branch
      %172 = sbr.rel (%p170) target = $region24
    $region23: #{upsample1d.1} parent=5 // pred_region
      // Predicated region
      $region25: #{upsample1d.1} parent=23 // pred_check
        %p173 = pneg %p44
      $region26: #{upsample1d.1} parent=23 // pred_check_branch
        %175 = sbr.rel (%p173) target = $region28
      $region27: #{upsample1d.1} parent=23 // pred_region
        %p176 = scmp.lt.s32.totalorder %s17, 1
        %s177 = scalar_select %p176, %s17, 1
        %p178 = scmp.lt.s32.totalorder %s18, 0
        %s179 = scalar_select %p178, %s18, 0
        %s180 = sadd.s32 %s179, %s177
        %s181 = smul.addr %s180, 4
        %s182 = scalar_lea.vmem %s0, %s181
      $region28: #{upsample1d.1} parent=23 // pred_fallthru
        _
      // Predicated region
      $region29: #{upsample1d.1} parent=23 // pred_check
        %p183 = pneg %p72
      $region30: #{upsample1d.1} parent=23 // pred_check_branch
        %185 = sbr.rel (%p183) target = $region32
      $region31: #{upsample1d.1} parent=23 // pred_region
        %p186 = scmp.lt.s32.totalorder %s17, 1
        %s187 = scalar_select %p186, %s17, 1
        %p188 = scmp.lt.s32.totalorder %s18, 0
        %s189 = scalar_select %p188, %s18, 0
        %s190 = sadd.s32 %s189, %s187
        %s191 = smul.addr %s190, 4
        %s192 = scalar_lea.vmem %s1, %s191
      $region32: #{upsample1d.1} parent=23 // pred_fallthru
        _
    $region24: #{upsample1d.1} parent=5 // pred_fallthru
      _
    %p193 = scmp.le.s32.totalorder 1, %s10
    %p194 = scmp.lt.s32.totalorder %s10, 3
    %p195 = pnand %p193, %p194
    %p196 = pneg %p195
    // Predicated region
    $region33: #{upsample1d.1} parent=5 // pred_check
      _
    $region34: #{upsample1d.1} parent=5 // pred_check_branch
      %198 = sbr.rel (%p195) target = $region36
    $region35: #{upsample1d.1} parent=5 // pred_region
      %s199 = ssub.s32 %s10, 1
      %p200 = scmp.lt.s32.totalorder %s19, 1
      %s201 = scalar_select %p200, %s19, 1
      %p202 = scmp.lt.s32.totalorder %s20, 0
      %s203 = scalar_select %p202, %s20, 0
      %s204 = sadd.s32 %s203, %s201
      %s205 = smul.addr %s204, 4
      %s206 = scalar_lea.vmem %s0, %s205
      %p207 = pneg %p50
      %p208 = pneg %p47
      %p209 = scmp.lt.s32.totalorder %s19, 1
      %s210 = scalar_select %p209, %s19, 1
      %p211 = scmp.lt.s32.totalorder %s20, 0
      %s212 = scalar_select %p211, %s20, 0
      %s213 = sadd.s32 %s212, %s210
      %s214 = smul.addr %s213, 4
      %s215 = scalar_lea.vmem %s1, %s214
      %p216 = pneg %p78
      %p217 = pneg %p75
      %p218 = pneg %p99
      %p219 = pneg %p96
      %p220 = pneg %p120
      %p221 = pneg %p117
      %p222 = pneg %p148
      %p223 = pneg %p145
      %p224 = scmp.lt.s32.totalorder %s19, 1
      %s225 = scalar_select %p224, %s19, 1
      %p226 = scmp.lt.s32.totalorder %s20, 0
      %s227 = scalar_select %p226, %s20, 0
      %s228 = smul.addr %s225, 2
      %s229 = sadd.s32 %s227, %s228
      %s230 = smul.addr %s229, 4
      %s231 = scalar_lea.vmem %s4, %s230
      %p232 = scmp.lt.s32.totalorder %s19, 1
      %s233 = scalar_select %p232, %s19, 1
      %p234 = scmp.lt.s32.totalorder %s20, 0
      %s235 = scalar_select %p234, %s20, 0
      %s236 = sadd.s32 %s235, %s233
      %s237 = smul.addr %s236, 4
      %s238 = scalar_lea.vmem %s0, %s237
      %p239 = scmp.lt.s32.totalorder %s19, 1
      %s240 = scalar_select %p239, %s19, 1
      %p241 = scmp.lt.s32.totalorder %s20, 0
      %s242 = scalar_select %p241, %s20, 0
      %s243 = sadd.s32 %s242, %s240
      %s244 = smul.addr %s243, 4
      %s245 = scalar_lea.vmem %s1, %s244
      %p246 = scmp.lt.s32.totalorder %s19, 1
      %s247 = scalar_select %p246, %s19, 1
      %p248 = scmp.lt.s32.totalorder %s20, 0
      %s249 = scalar_select %p248, %s20, 0
      %s250 = smul.addr %s247, 2
      %s251 = sadd.s32 %s249, %s250
      %s252 = smul.addr %s251, 4
      %s253 = scalar_lea.vmem %s4, %s252
      %v254 = vld [vmem:[%s238] sm:$0xf]
      %v255 = vld [vmem:[%s245] sm:$0xf]
      %257 = vrot.lane.b32.xlu0 %v254, 1
      %v258 = vpop.permute.xlu0 %257
      %vm260 = vcmask 7168
      %v261 = vsel %vm260, %v255, %v258
      %262 = vrot.lane.b32.xlu0 %v254, 127
      %v263 = vpop.permute.xlu0 %262
      %266 = vrot.lane.b32.xlu0 %v255, 14
      %v267 = vpop.permute.xlu0 %266
      %vm269 = vcmask 121856
      %v270 = vsel %vm269, %v263, %v267
      %v272 = vrot.slane %v261, 4
      %vm274 = vcmask 1043456
      %v275 = vsel %vm274, %v254, %v272
      %v277 = vrot.slane %v270, 4
      %v279 = vsel %vm274, %v254, %v277
      %v280 = vld [vmem:[%s3] sm:$0xf]
      %v281 = vld [vmem:[%s2] sm:$0xf]
      %283 = vset.pattern.permute.xlu0 0
      %284 = vperm.xlu0 %283, %v280
      %v285 = vpop.permute.xlu0 %284
      %vm287 = vcmask 64512
      %v289 = vsel %vm287, %v281, 0
      %291 = vmatpush.msra.mxu0 0.0
      %292 = vmatpush.msra.mxu0 0.0
      %293 = vmatpush.msra.mxu0 0.0
      %294 = vmatpush.msra.mxu0 0.0
      %295 = vmatpush.msra.mxu0 0.0
      %296 = vmatpush.msra.mxu0 0.0
      %297 = vmatpush.msra.mxu0 0.0
      %298 = vmatpush.msra.mxu0 0.0
      %299 = vmatpush.msra.mxu0 0.0
      %300 = vmatpush.msra.mxu0 0.0
      %301 = vmatpush.msra.mxu0 0.0
      %302 = vmatpush.msra.mxu0 0.0
      %303 = vmatpush.msra.mxu0 0.0
      %304 = vmatpush.msra.mxu0 0.0
      %305 = vmatpush.msra.mxu0 0.0
      %306 = vmatpush.msra.mxu0 %v275
      %307 = vmatmul.f32.gmra.mxu0 %v289
      %v308 = vpop.f32.mrf.mxu0
      %v309 = vadd.f32 %v285, %v308
      %310 = vdwg.mxu0
      %s311 = scalar_lea.vmem %s2, 4
      %v312 = vld [vmem:[%s311] sm:$0xf]
      %v314 = vsel %vm287, %v312, 0
      %316 = vmatpush.msra.mxu0 0.0
      %317 = vmatpush.msra.mxu0 0.0
      %318 = vmatpush.msra.mxu0 0.0
      %319 = vmatpush.msra.mxu0 0.0
      %320 = vmatpush.msra.mxu0 0.0
      %321 = vmatpush.msra.mxu0 0.0
      %322 = vmatpush.msra.mxu0 0.0
      %323 = vmatpush.msra.mxu0 0.0
      %324 = vmatpush.msra.mxu0 0.0
      %325 = vmatpush.msra.mxu0 0.0
      %326 = vmatpush.msra.mxu0 0.0
      %327 = vmatpush.msra.mxu0 0.0
      %328 = vmatpush.msra.mxu0 0.0
      %329 = vmatpush.msra.mxu0 0.0
      %330 = vmatpush.msra.mxu0 0.0
      %331 = vmatpush.msra.mxu0 %v279
      %332 = vmatmul.f32.gmra.mxu0 %v314
      %v333 = vpop.f32.mrf.mxu0
      %v334 = vadd.f32 %v285, %v333
      %335 = vdwg.mxu0
      %vm336 = vcmask 125952
      %337 = vst.msk [vmem:[%s253] sm:$0xf] %vm336, %v309
      %s338 = scalar_lea.vmem %s253, 4
      %339 = vst.msk [vmem:[%s338] sm:$0xf] %vm336, %v334
      %p340 = scmp.lt.s32.totalorder %s19, 1
      %s341 = scalar_select %p340, %s19, 1
      %p342 = scmp.lt.s32.totalorder %s20, 0
      %s343 = scalar_select %p342, %s20, 0
      %s344 = smul.addr %s341, 2
      %s345 = sadd.s32 %s343, %s344
      %s346 = smul.addr %s345, 4
      %s347 = scalar_lea.vmem %s4, %s346
      // Predicated region
      $region37: #{upsample1d.1} parent=35 // pred_check
        %p348 = pneg %p145
      $region38: #{upsample1d.1} parent=35 // pred_check_branch
        %350 = sbr.rel (%p348) target = $region40
      $region39: #{upsample1d.1} parent=35 // pred_region
        _
      $region40: #{upsample1d.1} parent=35 // pred_fallthru
        _
    $region36: #{upsample1d.1} parent=5 // pred_fallthru
      _
    %p351 = scmp.le.s32.totalorder 2, %s10
    // Predicated region
    $region41: #{upsample1d.1} parent=5 // pred_check
      %p352 = pneg %p351
    $region42: #{upsample1d.1} parent=5 // pred_check_branch
      %354 = sbr.rel (%p352) target = $region44
    $region43: #{upsample1d.1} parent=5 // pred_region
      %s355 = ssub.s32 %s10, 2
      // Predicated region
      $region45: #{upsample1d.1} parent=43 // pred_check
        %p356 = pneg %p151
      $region46: #{upsample1d.1} parent=43 // pred_check_branch
        %358 = sbr.rel (%p356) target = $region48
      $region47: #{upsample1d.1} parent=43 // pred_region
        %p359 = scmp.lt.s32.totalorder %s21, 1
        %s360 = scalar_select %p359, %s21, 1
        %p361 = scmp.lt.s32.totalorder %s22, 0
        %s362 = scalar_select %p361, %s22, 0
        %s363 = smul.addr %s360, 2
        %s364 = sadd.s32 %s362, %s363
        %s365 = smul.addr %s364, 4
        %s366 = scalar_lea.vmem %s4, %s365
      $region48: #{upsample1d.1} parent=43 // pred_fallthru
        _
    $region44: #{upsample1d.1} parent=5 // pred_fallthru
      _
  $region6: #{upsample1d.1} parent=0 // loop_footer
    %s14 = sadd.s32 1, %s10
  $region7: #{upsample1d.1} parent=0 // loop_footer_branch
    %9 = sbr.rel target = $region3
  $region8: #{upsample1d.1} parent=0 // loop_exit
    _

</llo_original>
